<compile_context>
chip_gen: v6e
topology: v6e:2x2x1
jax: 0.10.0
libtpu: 0.0.40
codegen_flags: <defaults>
</compile_context>

<pallas_src>
import jax
import jax.numpy as jnp
from jax.experimental import pallas as pl
from jax.experimental.pallas import tpu as pltpu

LEAKY_SLOPE = 0.01   # torch nn.LeakyReLU() default
LN_EPS = 1e-5        # torch nn.LayerNorm default

_MAX_PIXEL_TILE = 16384        # pixels (lane elements) per tile per sample
_MIN_STEP_BYTES = 64 * 1024    # don't split for dual-core below this block size


# ------------------------------ tiling helpers --------------------------------

def _round_up(x, m):
    return ((x + m - 1) // m) * m


def _largest_divisor_leq(n, cap):
    cap = max(1, min(n, cap))
    while n % cap:
        cap -= 1
    return cap


def _choose_tiling(n, c, hw):
    """Pick (batch sub-block NB, pixel tile T, padded HW, #pixel tiles)."""
    hw128 = _round_up(hw, 128)                    # lane-aligned pixel extent
    n_pix = pl.cdiv(hw128, _MAX_PIXEL_TILE)       # pixel tiles per sample
    t = _round_up(pl.cdiv(hw128, n_pix), 128)     # balanced, lane-multiple tile
    hw_pad = t * n_pix
    nb = 1
    if n_pix == 1 and n > 1:
        # Small images: block several batch samples per grid step so each DMA /
        # compute region is big enough to hide the fixed per-step cost.
        nb = _largest_divisor_leq(n, max(1, _MAX_PIXEL_TILE // t))
        if nb == n:
            # Give v7x's two TensorCores >=2 grid steps, but only when the
            # per-step block stays big enough to keep overhead amortized.
            half = _largest_divisor_leq(n, max(1, nb // 2))
            if half < nb and half * c * t * 4 >= _MIN_STEP_BYTES:
                nb = half
    return nb, t, hw_pad, n_pix


# ------------------------------ kernel body ----------------------------------

def _mapx_kernel(x_ref, w1_ref, w2_ref, w3_ref, vec_ref, o_ref):
    # x_ref / o_ref: (NB, C, T) -- channels on sublanes, pixels lane-dense.
    # vec_ref packs [b1 g1 bt1 b2 g2 bt2 b3 0] as (2C, 8) columns.
    c = o_ref.shape[1]
    w1 = w1_ref[...]
    w2 = w2_ref[...]
    w3 = w3_ref[...]
    v = vec_ref[...]
    b1, g1, bt1 = v[:, 0:1], v[:, 1:2], v[:, 2:3]
    b2, g2, bt2 = v[:, 3:4], v[:, 4:5], v[:, 5:6]
    b3 = v[0:c, 6:7]

    def ln_act(h, g, b):
        # LayerNorm over channels (sublane axis) + LeakyReLU.
        mu = jnp.mean(h, axis=0, keepdims=True)
        d = h - mu
        var = jnp.mean(d * d, axis=0, keepdims=True)
        h = d * jax.lax.rsqrt(var + LN_EPS) * g + b
        return jnp.maximum(h, LEAKY_SLOPE * h)   # == LeakyReLU for 0 < slope < 1

    for b in range(x_ref.shape[0]):              # static unroll over batch sub-block
        x = x_ref[b]                              # (C, T)
        h = jnp.dot(w1, x, preferred_element_type=jnp.float32) + b1
        h = ln_act(h, g1, bt1)
        h = jnp.dot(w2, h, preferred_element_type=jnp.float32) + b2
        h = ln_act(h, g2, bt2)
        o_ref[b] = (jnp.dot(w3, h, preferred_element_type=jnp.float32)
                    + b3).astype(o_ref.dtype)


# ------------------------------ pallas wrapper --------------------------------

def _pack_vectors(p):
    """Pack the 7 small bias/gamma/beta vectors into one (2C, 8) array."""
    h2 = p["w1"].shape[0]
    c = p["w3"].shape[0]
    b3_pad = jnp.zeros((h2, 1), jnp.float32).at[:c, :].set(p["b3"])
    zeros = jnp.zeros((h2, 1), jnp.float32)
    return jnp.concatenate(
        [p["b1"], p["g1"], p["bt1"], p["b2"], p["g2"], p["bt2"], b3_pad, zeros],
        axis=1)


def mapx_pallas(x_ncp, params):
    """x_ncp: (N, C, H*W) float32 -> (N, C, H*W) float32 (fused mapx MLP)."""
    n, c, hw = x_ncp.shape
    h2 = params["w1"].shape[0]                    # 2 * in_ch
    nb, t, hw_pad, n_pix = _choose_tiling(n, c, hw)
    if hw_pad != hw:
        # Lane-pad pixels so output stores stay full-width (no masked vst).
        x_ncp = jnp.pad(x_ncp, ((0, 0), (0, 0), (0, hw_pad - hw)))
    vecs = _pack_vectors(params)

    x_map = lambda i, j: (i, 0, j)
    const = lambda i, j: (0, 0)

    out = pl.pallas_call(
        _mapx_kernel,
        out_shape=jax.ShapeDtypeStruct((n, c, hw_pad), jnp.float32),
        grid=(n // nb, n_pix),
        in_specs=[
            pl.BlockSpec((nb, c, t), x_map),      # activations
            pl.BlockSpec((h2, c), const),         # w1 (resident)
            pl.BlockSpec((h2, h2), const),        # w2 (resident)
            pl.BlockSpec((c, h2), const),         # w3 (resident)
            pl.BlockSpec((h2, 8), const),         # packed bias/gamma/beta
        ],
        out_specs=pl.BlockSpec((nb, c, t), x_map),
        compiler_params=pltpu.CompilerParams(
            dimension_semantics=("parallel", "parallel"),
            # Footprint is only a few MiB even at T=16384; keep the scoped
            # limit conservative so the same setting is safe on v7x (64 MiB).
            vmem_limit_bytes=48 * 1024 * 1024),
    )(x_ncp, params["w1"], params["w2"], params["w3"], vecs)

    if hw_pad != hw:
        out = out[:, :, :hw]
    return out


# ------------------------------ forward + params ------------------------------

def init_params(key, in_ch):
    ks = jax.random.split(key, 10)
    h = 2 * in_ch

    def rnd(k, shape, scale):
        return (scale * jax.random.normal(k, shape)).astype(jnp.float32)

    return {
        # torch nn.Linear weight layout: (out_features, in_features)
        "w1": rnd(ks[0], (h, in_ch), 0.2), "b1": rnd(ks[1], (h, 1), 0.1),
        "g1": 1.0 + rnd(ks[2], (h, 1), 0.05), "bt1": rnd(ks[3], (h, 1), 0.05),
        "w2": rnd(ks[4], (h, h), 0.2), "b2": rnd(ks[5], (h, 1), 0.1),
        "g2": 1.0 + rnd(ks[6], (h, 1), 0.05), "bt2": rnd(ks[7], (h, 1), 0.05),
        "w3": rnd(ks[8], (in_ch, h), 0.2), "b3": rnd(ks[9], (in_ch, 1), 0.1),
    }


def basic_mca_block_forward(x_nchw, y_nchw, params):
    # x = mapx(x.permute(0,2,3,1)).permute(0,3,1,2): mapx mixes channels per
    # pixel only, so the channels-on-sublanes kernel consumes NCHW data
    # directly (reshape only, no transposes materialized in HBM).
    n, c, h, w = x_nchw.shape
    out = mapx_pallas(x_nchw.reshape(n, c, h * w), params).reshape(n, c, h, w)
    # TODO(synk): MCAB is not defined in the provided source; the num_blocks
    # MCAB(x, y) stages are treated as identity on x (y is unused).
    return out


# ------------------------------ pure-JAX reference ----------------------------

def mapx_reference(x_nchw, p):
    hp = jax.lax.Precision.HIGHEST

    def ln(h, g, b):
        mu = jnp.mean(h, axis=-1, keepdims=True)
        var = jnp.mean((h - mu) ** 2, axis=-1, keepdims=True)
        return (h - mu) * jax.lax.rsqrt(var + LN_EPS) * g + b

    def act(h):
        return jnp.where(h >= 0, h, LEAKY_SLOPE * h)

    x = jnp.transpose(x_nchw, (0, 2, 3, 1))                       # NHWC
    h = jnp.dot(x, p["w1"].T, precision=hp) + p["b1"][:, 0]
    h = act(ln(h, p["g1"][:, 0], p["bt1"][:, 0]))
    h = jnp.dot(h, p["w2"].T, precision=hp) + p["b2"][:, 0]
    h = act(ln(h, p["g2"][:, 0], p["bt2"][:, 0]))
    h = jnp.dot(h, p["w3"].T, precision=hp) + p["b3"][:, 0]
    return jnp.transpose(h, (0, 3, 1, 2))                         # NCHW


# ----------------------------------- main -------------------------------------

if __name__ == "__main__":
    # in_ch == out_ch == 8 (out_ch % 4 == 0, matching MCAB's heads=4 config)
    N, C, H, W = 2, 8, 16, 16
    key = jax.random.PRNGKey(0)
    kx, ky, kp = jax.random.split(key, 3)
    x = jax.random.normal(kx, (N, C, H, W), jnp.float32)
    y = jax.random.normal(ky, (N, C, H, W), jnp.float32)
    params = init_params(kp, C)

    out = jax.block_until_ready(jax.jit(basic_mca_block_forward)(x, y, params))
    ref = jax.block_until_ready(mapx_reference(x, params))

    assert out.shape == (N, C, H, W)
    assert bool(jnp.all(jnp.isfinite(out)))
    max_err = float(jnp.max(jnp.abs(out - ref)))
    assert max_err < 1e-4, f"max abs err vs reference: {max_err}"
    print("KERNEL_OK")
</pallas_src>

<mosaic_0001>
module attributes {stable_mosaic.version = 11 : i64} {
  func.func @_mapx_kernel(%arg0: i32, %arg1: i32, %arg2: memref<2x8x256xf32, #tpu.memory_space<vmem>>, %arg3: memref<16x8xf32, #tpu.memory_space<vmem>>, %arg4: memref<16x16xf32, #tpu.memory_space<vmem>>, %arg5: memref<8x16xf32, #tpu.memory_space<vmem>>, %arg6: memref<16x8xf32, #tpu.memory_space<vmem>>, %arg7: memref<2x8x256xf32, #tpu.memory_space<vmem>>) attributes {dimension_semantics = [#tpu.dimension_semantics<parallel>, #tpu.dimension_semantics<parallel>], iteration_bounds = array<i64: 1, 1>, scalar_prefetch = 0 : i64, scratch_operands = 0 : i64, tpu.core_type = #tpu.core_type<tc>, window_params = [{transform_indices = @transform_0, window_bounds = array<i64: 2, 8, 256>}, {pipeline_mode = #tpu.pipeline_mode<synchronous>, transform_indices = @transform_1, window_bounds = array<i64: 16, 8>}, {pipeline_mode = #tpu.pipeline_mode<synchronous>, transform_indices = @transform_2, window_bounds = array<i64: 16, 16>}, {pipeline_mode = #tpu.pipeline_mode<synchronous>, transform_indices = @transform_3, window_bounds = array<i64: 8, 16>}, {pipeline_mode = #tpu.pipeline_mode<synchronous>, transform_indices = @transform_4, window_bounds = array<i64: 16, 8>}, {transform_indices = @transform_5, window_bounds = array<i64: 2, 8, 256>}]} {
    %c0 = arith.constant 0 : index
    %c0_0 = arith.constant 0 : index
    %0 = vector.load %arg3[%c0, %c0_0] : memref<16x8xf32, #tpu.memory_space<vmem>>, vector<16x8xf32>
    %c0_1 = arith.constant 0 : index
    %c0_2 = arith.constant 0 : index
    %1 = vector.load %arg4[%c0_1, %c0_2] : memref<16x16xf32, #tpu.memory_space<vmem>>, vector<16x16xf32>
    %c0_3 = arith.constant 0 : index
    %c0_4 = arith.constant 0 : index
    %2 = vector.load %arg5[%c0_3, %c0_4] : memref<8x16xf32, #tpu.memory_space<vmem>>, vector<8x16xf32>
    %c0_5 = arith.constant 0 : index
    %c0_6 = arith.constant 0 : index
    %3 = vector.load %arg6[%c0_5, %c0_6] : memref<16x8xf32, #tpu.memory_space<vmem>>, vector<16x8xf32>
    %4 = vector.extract_strided_slice %3 {offsets = [0, 0], sizes = [16, 1], strides = [1, 1]} : vector<16x8xf32> to vector<16x1xf32>
    %5 = vector.extract_strided_slice %3 {offsets = [0, 1], sizes = [16, 1], strides = [1, 1]} : vector<16x8xf32> to vector<16x1xf32>
    %6 = vector.extract_strided_slice %3 {offsets = [0, 2], sizes = [16, 1], strides = [1, 1]} : vector<16x8xf32> to vector<16x1xf32>
    %7 = vector.extract_strided_slice %3 {offsets = [0, 3], sizes = [16, 1], strides = [1, 1]} : vector<16x8xf32> to vector<16x1xf32>
    %8 = vector.extract_strided_slice %3 {offsets = [0, 4], sizes = [16, 1], strides = [1, 1]} : vector<16x8xf32> to vector<16x1xf32>
    %9 = vector.extract_strided_slice %3 {offsets = [0, 5], sizes = [16, 1], strides = [1, 1]} : vector<16x8xf32> to vector<16x1xf32>
    %10 = vector.extract_strided_slice %3 {offsets = [0, 6], sizes = [8, 1], strides = [1, 1]} : vector<16x8xf32> to vector<8x1xf32>
    %c0_7 = arith.constant 0 : index
    %c0_8 = arith.constant 0 : index
    %c0_9 = arith.constant 0 : index
    %11 = vector.load %arg2[%c0_7, %c0_8, %c0_9] : memref<2x8x256xf32, #tpu.memory_space<vmem>>, vector<1x8x256xf32>
    %12 = vector.shape_cast %11 : vector<1x8x256xf32> to vector<8x256xf32>
    %cst = arith.constant dense<0.000000e+00> : vector<16x256xf32>
    %13 = tpu.matmul %0, %12, %cst {dimension_numbers = #tpu.dot_dimension_numbers<[1], [0], [0], [1], [0, 0, 1, 1], [], []>} : vector<16x8xf32>, vector<8x256xf32>, vector<16x256xf32> -> vector<16x256xf32>
    %14 = vector.broadcast %4 : vector<16x1xf32> to vector<16x256xf32>
    %15 = arith.addf %13, %14 : vector<16x256xf32>
    %cst_10 = arith.constant dense<0.000000e+00> : vector<256xf32>
    %16 = vector.multi_reduction <add>, %15, %cst_10 [0] : vector<16x256xf32> to vector<256xf32>
    %17 = vector.shape_cast %16 : vector<256xf32> to vector<1x256xf32>
    %cst_11 = arith.constant 1.600000e+01 : f32
    %18 = vector.broadcast %cst_11 : f32 to vector<1x256xf32>
    %19 = arith.divf %17, %18 : vector<1x256xf32>
    %20 = vector.broadcast %19 : vector<1x256xf32> to vector<16x256xf32>
    %21 = arith.subf %15, %20 : vector<16x256xf32>
    %22 = arith.mulf %21, %21 : vector<16x256xf32>
    %cst_12 = arith.constant dense<0.000000e+00> : vector<256xf32>
    %23 = vector.multi_reduction <add>, %22, %cst_12 [0] : vector<16x256xf32> to vector<256xf32>
    %24 = vector.shape_cast %23 : vector<256xf32> to vector<1x256xf32>
    %cst_13 = arith.constant 1.600000e+01 : f32
    %25 = vector.broadcast %cst_13 : f32 to vector<1x256xf32>
    %26 = arith.divf %24, %25 : vector<1x256xf32>
    %cst_14 = arith.constant 9.99999974E-6 : f32
    %27 = vector.broadcast %cst_14 : f32 to vector<1x256xf32>
    %28 = arith.addf %26, %27 : vector<1x256xf32>
    %29 = math.rsqrt %28 : vector<1x256xf32>
    %30 = vector.broadcast %29 : vector<1x256xf32> to vector<16x256xf32>
    %31 = arith.mulf %21, %30 : vector<16x256xf32>
    %32 = vector.broadcast %5 : vector<16x1xf32> to vector<16x256xf32>
    %33 = arith.mulf %31, %32 : vector<16x256xf32>
    %34 = vector.broadcast %6 : vector<16x1xf32> to vector<16x256xf32>
    %35 = arith.addf %33, %34 : vector<16x256xf32>
    %cst_15 = arith.constant 0.00999999977 : f32
    %36 = vector.broadcast %cst_15 : f32 to vector<16x256xf32>
    %37 = arith.mulf %36, %35 : vector<16x256xf32>
    %38 = arith.maximumf %35, %37 : vector<16x256xf32>
    %cst_16 = arith.constant dense<0.000000e+00> : vector<16x256xf32>
    %39 = tpu.matmul %1, %38, %cst_16 {dimension_numbers = #tpu.dot_dimension_numbers<[1], [0], [0], [1], [0, 0, 1, 1], [], []>} : vector<16x16xf32>, vector<16x256xf32>, vector<16x256xf32> -> vector<16x256xf32>
    %40 = vector.broadcast %7 : vector<16x1xf32> to vector<16x256xf32>
    %41 = arith.addf %39, %40 : vector<16x256xf32>
    %cst_17 = arith.constant dense<0.000000e+00> : vector<256xf32>
    %42 = vector.multi_reduction <add>, %41, %cst_17 [0] : vector<16x256xf32> to vector<256xf32>
    %43 = vector.shape_cast %42 : vector<256xf32> to vector<1x256xf32>
    %cst_18 = arith.constant 1.600000e+01 : f32
    %44 = vector.broadcast %cst_18 : f32 to vector<1x256xf32>
    %45 = arith.divf %43, %44 : vector<1x256xf32>
    %46 = vector.broadcast %45 : vector<1x256xf32> to vector<16x256xf32>
    %47 = arith.subf %41, %46 : vector<16x256xf32>
    %48 = arith.mulf %47, %47 : vector<16x256xf32>
    %cst_19 = arith.constant dense<0.000000e+00> : vector<256xf32>
    %49 = vector.multi_reduction <add>, %48, %cst_19 [0] : vector<16x256xf32> to vector<256xf32>
    %50 = vector.shape_cast %49 : vector<256xf32> to vector<1x256xf32>
    %cst_20 = arith.constant 1.600000e+01 : f32
    %51 = vector.broadcast %cst_20 : f32 to vector<1x256xf32>
    %52 = arith.divf %50, %51 : vector<1x256xf32>
    %cst_21 = arith.constant 9.99999974E-6 : f32
    %53 = vector.broadcast %cst_21 : f32 to vector<1x256xf32>
    %54 = arith.addf %52, %53 : vector<1x256xf32>
    %55 = math.rsqrt %54 : vector<1x256xf32>
    %56 = vector.broadcast %55 : vector<1x256xf32> to vector<16x256xf32>
    %57 = arith.mulf %47, %56 : vector<16x256xf32>
    %58 = vector.broadcast %8 : vector<16x1xf32> to vector<16x256xf32>
    %59 = arith.mulf %57, %58 : vector<16x256xf32>
    %60 = vector.broadcast %9 : vector<16x1xf32> to vector<16x256xf32>
    %61 = arith.addf %59, %60 : vector<16x256xf32>
    %cst_22 = arith.constant 0.00999999977 : f32
    %62 = vector.broadcast %cst_22 : f32 to vector<16x256xf32>
    %63 = arith.mulf %62, %61 : vector<16x256xf32>
    %64 = arith.maximumf %61, %63 : vector<16x256xf32>
    %cst_23 = arith.constant dense<0.000000e+00> : vector<8x256xf32>
    %65 = tpu.matmul %2, %64, %cst_23 {dimension_numbers = #tpu.dot_dimension_numbers<[1], [0], [0], [1], [0, 0, 1, 1], [], []>} : vector<8x16xf32>, vector<16x256xf32>, vector<8x256xf32> -> vector<8x256xf32>
    %66 = vector.broadcast %10 : vector<8x1xf32> to vector<8x256xf32>
    %67 = arith.addf %65, %66 : vector<8x256xf32>
    %c0_24 = arith.constant 0 : index
    %c0_25 = arith.constant 0 : index
    %c0_26 = arith.constant 0 : index
    %68 = vector.load %arg7[%c0_24, %c0_25, %c0_26] : memref<2x8x256xf32, #tpu.memory_space<vmem>>, vector<1x8x256xf32>
    %69 = vector.shape_cast %68 : vector<1x8x256xf32> to vector<8x256xf32>
    %70 = vector.shape_cast %67 : vector<8x256xf32> to vector<1x8x256xf32>
    tpu.vector_store %arg7[%c0_24, %c0_25, %c0_26], %70 {strides = array<i32>} : memref<2x8x256xf32, #tpu.memory_space<vmem>>, vector<1x8x256xf32>,
    %c1 = arith.constant 1 : index
    %c0_27 = arith.constant 0 : index
    %c0_28 = arith.constant 0 : index
    %71 = vector.load %arg2[%c1, %c0_27, %c0_28] : memref<2x8x256xf32, #tpu.memory_space<vmem>>, vector<1x8x256xf32>
    %72 = vector.shape_cast %71 : vector<1x8x256xf32> to vector<8x256xf32>
    %cst_29 = arith.constant dense<0.000000e+00> : vector<16x256xf32>
    %73 = tpu.matmul %0, %72, %cst_29 {dimension_numbers = #tpu.dot_dimension_numbers<[1], [0], [0], [1], [0, 0, 1, 1], [], []>} : vector<16x8xf32>, vector<8x256xf32>, vector<16x256xf32> -> vector<16x256xf32>
    %74 = vector.broadcast %4 : vector<16x1xf32> to vector<16x256xf32>
    %75 = arith.addf %73, %74 : vector<16x256xf32>
    %cst_30 = arith.constant dense<0.000000e+00> : vector<256xf32>
    %76 = vector.multi_reduction <add>, %75, %cst_30 [0] : vector<16x256xf32> to vector<256xf32>
    %77 = vector.shape_cast %76 : vector<256xf32> to vector<1x256xf32>
    %cst_31 = arith.constant 1.600000e+01 : f32
    %78 = vector.broadcast %cst_31 : f32 to vector<1x256xf32>
    %79 = arith.divf %77, %78 : vector<1x256xf32>
    %80 = vector.broadcast %79 : vector<1x256xf32> to vector<16x256xf32>
    %81 = arith.subf %75, %80 : vector<16x256xf32>
    %82 = arith.mulf %81, %81 : vector<16x256xf32>
    %cst_32 = arith.constant dense<0.000000e+00> : vector<256xf32>
    %83 = vector.multi_reduction <add>, %82, %cst_32 [0] : vector<16x256xf32> to vector<256xf32>
    %84 = vector.shape_cast %83 : vector<256xf32> to vector<1x256xf32>
    %cst_33 = arith.constant 1.600000e+01 : f32
    %85 = vector.broadcast %cst_33 : f32 to vector<1x256xf32>
    %86 = arith.divf %84, %85 : vector<1x256xf32>
    %cst_34 = arith.constant 9.99999974E-6 : f32
    %87 = vector.broadcast %cst_34 : f32 to vector<1x256xf32>
    %88 = arith.addf %86, %87 : vector<1x256xf32>
    %89 = math.rsqrt %88 : vector<1x256xf32>
    %90 = vector.broadcast %89 : vector<1x256xf32> to vector<16x256xf32>
    %91 = arith.mulf %81, %90 : vector<16x256xf32>
    %92 = vector.broadcast %5 : vector<16x1xf32> to vector<16x256xf32>
    %93 = arith.mulf %91, %92 : vector<16x256xf32>
    %94 = vector.broadcast %6 : vector<16x1xf32> to vector<16x256xf32>
    %95 = arith.addf %93, %94 : vector<16x256xf32>
    %cst_35 = arith.constant 0.00999999977 : f32
    %96 = vector.broadcast %cst_35 : f32 to vector<16x256xf32>
    %97 = arith.mulf %96, %95 : vector<16x256xf32>
    %98 = arith.maximumf %95, %97 : vector<16x256xf32>
    %cst_36 = arith.constant dense<0.000000e+00> : vector<16x256xf32>
    %99 = tpu.matmul %1, %98, %cst_36 {dimension_numbers = #tpu.dot_dimension_numbers<[1], [0], [0], [1], [0, 0, 1, 1], [], []>} : vector<16x16xf32>, vector<16x256xf32>, vector<16x256xf32> -> vector<16x256xf32>
    %100 = vector.broadcast %7 : vector<16x1xf32> to vector<16x256xf32>
    %101 = arith.addf %99, %100 : vector<16x256xf32>
    %cst_37 = arith.constant dense<0.000000e+00> : vector<256xf32>
    %102 = vector.multi_reduction <add>, %101, %cst_37 [0] : vector<16x256xf32> to vector<256xf32>
    %103 = vector.shape_cast %102 : vector<256xf32> to vector<1x256xf32>
    %cst_38 = arith.constant 1.600000e+01 : f32
    %104 = vector.broadcast %cst_38 : f32 to vector<1x256xf32>
    %105 = arith.divf %103, %104 : vector<1x256xf32>
    %106 = vector.broadcast %105 : vector<1x256xf32> to vector<16x256xf32>
    %107 = arith.subf %101, %106 : vector<16x256xf32>
    %108 = arith.mulf %107, %107 : vector<16x256xf32>
    %cst_39 = arith.constant dense<0.000000e+00> : vector<256xf32>
    %109 = vector.multi_reduction <add>, %108, %cst_39 [0] : vector<16x256xf32> to vector<256xf32>
    %110 = vector.shape_cast %109 : vector<256xf32> to vector<1x256xf32>
    %cst_40 = arith.constant 1.600000e+01 : f32
    %111 = vector.broadcast %cst_40 : f32 to vector<1x256xf32>
    %112 = arith.divf %110, %111 : vector<1x256xf32>
    %cst_41 = arith.constant 9.99999974E-6 : f32
    %113 = vector.broadcast %cst_41 : f32 to vector<1x256xf32>
    %114 = arith.addf %112, %113 : vector<1x256xf32>
    %115 = math.rsqrt %114 : vector<1x256xf32>
    %116 = vector.broadcast %115 : vector<1x256xf32> to vector<16x256xf32>
    %117 = arith.mulf %107, %116 : vector<16x256xf32>
    %118 = vector.broadcast %8 : vector<16x1xf32> to vector<16x256xf32>
    %119 = arith.mulf %117, %118 : vector<16x256xf32>
    %120 = vector.broadcast %9 : vector<16x1xf32> to vector<16x256xf32>
    %121 = arith.addf %119, %120 : vector<16x256xf32>
    %cst_42 = arith.constant 0.00999999977 : f32
    %122 = vector.broadcast %cst_42 : f32 to vector<16x256xf32>
    %123 = arith.mulf %122, %121 : vector<16x256xf32>
    %124 = arith.maximumf %121, %123 : vector<16x256xf32>
    %cst_43 = arith.constant dense<0.000000e+00> : vector<8x256xf32>
    %125 = tpu.matmul %2, %124, %cst_43 {dimension_numbers = #tpu.dot_dimension_numbers<[1], [0], [0], [1], [0, 0, 1, 1], [], []>} : vector<8x16xf32>, vector<16x256xf32>, vector<8x256xf32> -> vector<8x256xf32>
    %126 = vector.broadcast %10 : vector<8x1xf32> to vector<8x256xf32>
    %127 = arith.addf %125, %126 : vector<8x256xf32>
    %c1_44 = arith.constant 1 : index
    %c0_45 = arith.constant 0 : index
    %c0_46 = arith.constant 0 : index
    %128 = vector.load %arg7[%c1_44, %c0_45, %c0_46] : memref<2x8x256xf32, #tpu.memory_space<vmem>>, vector<1x8x256xf32>
    %129 = vector.shape_cast %128 : vector<1x8x256xf32> to vector<8x256xf32>
    %130 = vector.shape_cast %127 : vector<8x256xf32> to vector<1x8x256xf32>
    tpu.vector_store %arg7[%c1_44, %c0_45, %c0_46], %130 {strides = array<i32>} : memref<2x8x256xf32, #tpu.memory_space<vmem>>, vector<1x8x256xf32>,
    return
  }
  func.func @transform_0(%arg0: i32, %arg1: i32) -> (i32, i32, i32) {
    %c0_i32 = arith.constant 0 : i32
    %c0_i32_0 = arith.constant 0 : i32
    return %arg0, %c0_i32, %arg1 : i32, i32, i32
  }
  func.func @transform_1(%arg0: i32, %arg1: i32) -> (i32, i32) {
    %c0_i32 = arith.constant 0 : i32
    %c0_i32_0 = arith.constant 0 : i32
    %c0_i32_1 = arith.constant 0 : i32
    return %c0_i32, %c0_i32_0 : i32, i32
  }
  func.func @transform_2(%arg0: i32, %arg1: i32) -> (i32, i32) {
    %c0_i32 = arith.constant 0 : i32
    %c0_i32_0 = arith.constant 0 : i32
    %c0_i32_1 = arith.constant 0 : i32
    return %c0_i32, %c0_i32_0 : i32, i32
  }
  func.func @transform_3(%arg0: i32, %arg1: i32) -> (i32, i32) {
    %c0_i32 = arith.constant 0 : i32
    %c0_i32_0 = arith.constant 0 : i32
    %c0_i32_1 = arith.constant 0 : i32
    return %c0_i32, %c0_i32_0 : i32, i32
  }
  func.func @transform_4(%arg0: i32, %arg1: i32) -> (i32, i32) {
    %c0_i32 = arith.constant 0 : i32
    %c0_i32_0 = arith.constant 0 : i32
    %c0_i32_1 = arith.constant 0 : i32
    return %c0_i32, %c0_i32_0 : i32, i32
  }
  func.func @transform_5(%arg0: i32, %arg1: i32) -> (i32, i32, i32) {
    %c0_i32 = arith.constant 0 : i32
    %c0_i32_0 = arith.constant 0 : i32
    return %arg0, %c0_i32, %arg1 : i32, i32, i32
  }
}

</mosaic_0001>

<llo_original>
// kernel: basic_mca_block_forward.1
$region0: #{basic_mca_block_forward.1}
  #allocation0 [shape = 'u32[]', space=smem, size = 0x4, offset = 0x4, fixed_abs, tag = 'smem constant byte address 0x4 - core index']
  #allocation1 [shape = 'u32[144,128]{1,0:T(1,128)}', space=vmem, size = 0x12000, scoped, tag = 'internal scratch']
  %s0 = inlined_call_operand.vmem [shape: f32[2,8,256], index: 0, kind: input, shape index: {}]
  %s1 = inlined_call_operand.vmem [shape: f32[16,8], index: 1, kind: input, shape index: {}]
  %s2 = inlined_call_operand.vmem [shape: f32[16,16], index: 2, kind: input, shape index: {}]
  %s3 = inlined_call_operand.vmem [shape: f32[8,16], index: 3, kind: input, shape index: {}]
  %s4 = inlined_call_operand.vmem [shape: f32[16,8], index: 4, kind: input, shape index: {}]
  %s5 = inlined_call_operand.vmem [shape: f32[2,8,256], index: 5, kind: output, shape index: {}]
  %s6 = sld [smem:[#allocation0]]
  $region30: #{basic_mca_block_forward.1} parent=0
    _
  %s8 = ssub.s32 1, %s6
  %s9 = scalar_select 0, %s8, %s6
  // Predicated region
  $region2: #{basic_mca_block_forward.1} parent=0 // pred_check
    _
  $region3: #{basic_mca_block_forward.1} parent=0 // pred_check_branch
    %11 = sbr.rel (0) target = $region5
  $region4: #{basic_mca_block_forward.1} parent=0 // pred_region
    _
  $region5: #{basic_mca_block_forward.1} parent=0 // pred_fallthru
    _
  // Predicated region
  $region6: #{basic_mca_block_forward.1} parent=0 // pred_check
    _
  $region7: #{basic_mca_block_forward.1} parent=0 // pred_check_branch
    %13 = sbr.rel (0) target = $region9
  $region8: #{basic_mca_block_forward.1} parent=0 // pred_region
    _
  $region9: #{basic_mca_block_forward.1} parent=0 // pred_fallthru
    _
  // Predicated region
  $region10: #{basic_mca_block_forward.1} parent=0 // pred_check
    _
  $region11: #{basic_mca_block_forward.1} parent=0 // pred_check_branch
    %15 = sbr.rel (0) target = $region13
  $region12: #{basic_mca_block_forward.1} parent=0 // pred_region
    _
  $region13: #{basic_mca_block_forward.1} parent=0 // pred_fallthru
    _
  // Predicated region
  $region14: #{basic_mca_block_forward.1} parent=0 // pred_check
    _
  $region15: #{basic_mca_block_forward.1} parent=0 // pred_check_branch
    %17 = sbr.rel (0) target = $region17
  $region16: #{basic_mca_block_forward.1} parent=0 // pred_region
    _
  $region17: #{basic_mca_block_forward.1} parent=0 // pred_fallthru
    _
  // Predicated region
  $region18: #{basic_mca_block_forward.1} parent=0 // pred_check
    _
  $region19: #{basic_mca_block_forward.1} parent=0 // pred_check_branch
    %19 = sbr.rel (0) target = $region21
  $region20: #{basic_mca_block_forward.1} parent=0 // pred_region
    _
  $region21: #{basic_mca_block_forward.1} parent=0 // pred_fallthru
    _
  %v20 = vld [vmem:[%s1] sm:$0xff]
  %v21 = vld [vmem:[%s1 + $0x8] sm:$0xff]
  %v22 = vld [vmem:[%s2] sm:$0xff]
  %v23 = vld [vmem:[%s2 + $0x8] sm:$0xff]
  %v24 = vld [vmem:[%s3] sm:$0xff]
  %v25 = vld [vmem:[%s4] sm:$0xff]
  %v26 = vld [vmem:[%s4 + $0x8] sm:$0xff]
  %v27 = vld [vmem:[%s0] sm:$0xff]
  %v28 = vld [vmem:[%s0 + $0x8] sm:$0xff]
  %30 = vset.pattern.permute.xlu0 0
  %31 = vperm.xlu0 %30, %v25
  %v32 = vpop.permute.xlu0 %31
  %35 = vset.pattern.permute.xlu0 0
  %36 = vperm.xlu0 %35, %v26
  %v37 = vpop.permute.xlu0 %36
  %vm39 = vcmask 64512
  %v41 = vsel %vm39, %v20, 0
  %v44 = vsel %vm39, %v21, 0
  %46 = vmatprep.subr.mxu0 0.0
  %47 = vmatpush1.msra.mxu0 0.0
  %48 = vmatprep.subr.mxu0 0.0
  %49 = vmatpush1.msra.mxu0 0.0
  %50 = vmatprep.subr.mxu0 0.0
  %51 = vmatpush1.msra.mxu0 0.0
  %52 = vmatprep.subr.mxu0 0.0
  %53 = vmatpush1.msra.mxu0 0.0
  %54 = vmatprep.subr.mxu0 0.0
  %55 = vmatpush1.msra.mxu0 0.0
  %56 = vmatprep.subr.mxu0 0.0
  %57 = vmatpush1.msra.mxu0 0.0
  %58 = vmatprep.subr.mxu0 0.0
  %59 = vmatpush1.msra.mxu0 0.0
  %60 = vmatprep.subr.mxu0 0.0
  %61 = vmatpush1.msra.mxu0 0.0
  %62 = vmatprep.subr.mxu0 0.0
  %63 = vmatpush1.msra.mxu0 0.0
  %64 = vmatprep.subr.mxu0 0.0
  %65 = vmatpush1.msra.mxu0 0.0
  %66 = vmatprep.subr.mxu0 0.0
  %67 = vmatpush1.msra.mxu0 0.0
  %68 = vmatprep.subr.mxu0 0.0
  %69 = vmatpush1.msra.mxu0 0.0
  %70 = vmatprep.subr.mxu0 0.0
  %71 = vmatpush1.msra.mxu0 0.0
  %72 = vmatprep.subr.mxu0 0.0
  %73 = vmatpush1.msra.mxu0 0.0
  %74 = vmatprep.subr.mxu0 0.0
  %75 = vmatpush1.msra.mxu0 0.0
  %76 = vmatprep.subr.mxu0 %v28
  %77 = vmatpush1.msra.mxu0 %v27
  %78 = vmatprep.subr.mxu0 0.0
  %79 = vmatpush2.msra.mxu0 0.0
  %80 = vmatprep.subr.mxu0 0.0
  %81 = vmatpush2.msra.mxu0 0.0
  %82 = vmatprep.subr.mxu0 0.0
  %83 = vmatpush2.msra.mxu0 0.0
  %84 = vmatprep.subr.mxu0 0.0
  %85 = vmatpush2.msra.mxu0 0.0
  %86 = vmatprep.subr.mxu0 0.0
  %87 = vmatpush2.msra.mxu0 0.0
  %88 = vmatprep.subr.mxu0 0.0
  %89 = vmatpush2.msra.mxu0 0.0
  %90 = vmatprep.subr.mxu0 0.0
  %91 = vmatpush2.msra.mxu0 0.0
  %92 = vmatprep.subr.mxu0 0.0
  %93 = vmatpush2.msra.mxu0 0.0
  %94 = vmatprep.subr.mxu0 0.0
  %95 = vmatpush2.msra.mxu0 0.0
  %96 = vmatprep.subr.mxu0 0.0
  %97 = vmatpush2.msra.mxu0 0.0
  %98 = vmatprep.subr.mxu0 0.0
  %99 = vmatpush2.msra.mxu0 0.0
  %100 = vmatprep.subr.mxu0 0.0
  %101 = vmatpush2.msra.mxu0 0.0
  %102 = vmatprep.subr.mxu0 0.0
  %103 = vmatpush2.msra.mxu0 0.0
  %104 = vmatprep.subr.mxu0 0.0
  %105 = vmatpush2.msra.mxu0 0.0
  %106 = vmatprep.subr.mxu0 0.0
  %107 = vmatpush2.msra.mxu0 0.0
  %108 = vmatprep.subr.mxu0 0.0
  %109 = vmatpush2.msra.mxu0 0.0
  %110 = vmatprep.mubr.f32.mxu0 0.0
  %111 = vmatmul.mubr.f32.gmra.mxu0 %v41
  %v112 = vpop.f32.mrf.mxu0
  %v113 = vadd.f32 %v32, %v112
  %v114 = vpop.f32.mrf.mxu0
  %v115 = vadd.f32 %v32, %v114
  %116 = vmatprep.mubr.f32.mxu0 0.0
  %117 = vmatmul.mubr.f32.gmra.mxu0 %v44
  %v118 = vpop.f32.mrf.mxu0
  %v119 = vadd.f32 %v37, %v118
  %v120 = vpop.f32.mrf.mxu0
  %v121 = vadd.f32 %v37, %v120
  %122 = vdwg.mxu0
  %v123 = vadd.f32 %v113, %v119
  %v124 = vrot.slane %v123, 4
  %v125 = vadd.f32 %v123, %v124
  %v126 = vrot.slane %v125, 2
  %v127 = vadd.f32 %v125, %v126
  %v128 = vrot.slane %v127, 1
  %v129 = vadd.f32 %v127, %v128
  %v130 = vadd.f32 %v115, %v121
  %v131 = vrot.slane %v130, 4
  %v132 = vadd.f32 %v130, %v131
  %v133 = vrot.slane %v132, 2
  %v134 = vadd.f32 %v132, %v133
  %v135 = vrot.slane %v134, 1
  %v136 = vadd.f32 %v134, %v135
  %v137 = vrcp.pop 16.0
  %v138 = vmul.f32 %v129, %v137
  %v139 = vmul.f32 %v136, %v137
  %v140 = vsub.f32 %v113, %v138
  %v141 = vsub.f32 %v115, %v139
  %v142 = vsub.f32 %v119, %v138
  %v143 = vsub.f32 %v121, %v139
  %v144 = vmul.f32 %v140, %v140
  %v145 = vmul.f32 %v141, %v141
  %v146 = vmul.f32 %v142, %v142
  %v147 = vmul.f32 %v143, %v143
  %v148 = vadd.f32 %v144, %v146
  %v149 = vrot.slane %v148, 4
  %v150 = vadd.f32 %v148, %v149
  %v151 = vrot.slane %v150, 2
  %v152 = vadd.f32 %v150, %v151
  %v153 = vrot.slane %v152, 1
  %v154 = vadd.f32 %v152, %v153
  %v155 = vadd.f32 %v145, %v147
  %v156 = vrot.slane %v155, 4
  %v157 = vadd.f32 %v155, %v156
  %v158 = vrot.slane %v157, 2
  %v159 = vadd.f32 %v157, %v158
  %v160 = vrot.slane %v159, 1
  %v161 = vadd.f32 %v159, %v160
  %v162 = vmul.f32 %v154, %v137
  %v163 = vmul.f32 %v161, %v137
  %v164 = vadd.f32 %v162, 1e-05
  %v165 = vadd.f32 %v163, 1e-05
  %v166 = vrsqrt.pop %v164
  %v167 = vrsqrt.pop %v165
  %v168 = vmul.f32 %v140, %v166
  %v169 = vmul.f32 %v141, %v167
  %v170 = vmul.f32 %v142, %v166
  %v171 = vmul.f32 %v143, %v167
  %172 = vset.pattern.permute.xlu0 1
  %173 = vperm.xlu0 %172, %v25
  %v174 = vpop.permute.xlu0 %173
  %176 = vset.pattern.permute.xlu0 1
  %177 = vperm.xlu0 %176, %v26
  %v178 = vpop.permute.xlu0 %177
  %v180 = vmul.f32 %v168, %v174
  %v181 = vmul.f32 %v169, %v174
  %v182 = vmul.f32 %v170, %v178
  %v183 = vmul.f32 %v171, %v178
  %184 = vset.pattern.permute.xlu0 2
  %185 = vperm.xlu0 %184, %v25
  %v186 = vpop.permute.xlu0 %185
  %188 = vset.pattern.permute.xlu0 2
  %189 = vperm.xlu0 %188, %v26
  %v190 = vpop.permute.xlu0 %189
  %v192 = vadd.f32 %v180, %v186
  %v193 = vadd.f32 %v181, %v186
  %v194 = vadd.f32 %v182, %v190
  %v195 = vadd.f32 %v183, %v190
  %v196 = vmul.f32 %v192, 0.01
  %v197 = vmul.f32 %v193, 0.01
  %v198 = vmul.f32 %v194, 0.01
  %v199 = vmul.f32 %v195, 0.01
  %v200 = vmax.f32 %v192, %v196
  %v201 = vmax.f32 %v193, %v197
  %v202 = vmax.f32 %v194, %v198
  %v203 = vmax.f32 %v195, %v199
  %204 = vset.pattern.permute.xlu0 3
  %205 = vperm.xlu0 %204, %v25
  %v206 = vpop.permute.xlu0 %205
  %208 = vset.pattern.permute.xlu0 3
  %209 = vperm.xlu0 %208, %v26
  %v210 = vpop.permute.xlu0 %209
  %vm212 = vcmask 130048
  %v214 = vsel %vm212, %v22, 0
  %v217 = vsel %vm212, %v23, 0
  %219 = vmatprep.subr.mxu0 0.0
  %220 = vmatpush1.msra.mxu0 0.0
  %221 = vmatprep.subr.mxu0 0.0
  %222 = vmatpush1.msra.mxu0 0.0
  %223 = vmatprep.subr.mxu0 0.0
  %224 = vmatpush1.msra.mxu0 0.0
  %225 = vmatprep.subr.mxu0 0.0
  %226 = vmatpush1.msra.mxu0 0.0
  %227 = vmatprep.subr.mxu0 0.0
  %228 = vmatpush1.msra.mxu0 0.0
  %229 = vmatprep.subr.mxu0 0.0
  %230 = vmatpush1.msra.mxu0 0.0
  %231 = vmatprep.subr.mxu0 0.0
  %232 = vmatpush1.msra.mxu0 0.0
  %233 = vmatprep.subr.mxu0 0.0
  %234 = vmatpush1.msra.mxu0 0.0
  %235 = vmatprep.subr.mxu0 0.0
  %236 = vmatpush1.msra.mxu0 0.0
  %237 = vmatprep.subr.mxu0 0.0
  %238 = vmatpush1.msra.mxu0 0.0
  %239 = vmatprep.subr.mxu0 0.0
  %240 = vmatpush1.msra.mxu0 0.0
  %241 = vmatprep.subr.mxu0 0.0
  %242 = vmatpush1.msra.mxu0 0.0
  %243 = vmatprep.subr.mxu0 0.0
  %244 = vmatpush1.msra.mxu0 0.0
  %245 = vmatprep.subr.mxu0 0.0
  %246 = vmatpush1.msra.mxu0 0.0
  %247 = vmatprep.subr.mxu0 %v203
  %248 = vmatpush1.msra.mxu0 %v202
  %249 = vmatprep.subr.mxu0 %v201
  %250 = vmatpush1.msra.mxu0 %v200
  %251 = vmatprep.subr.mxu0 0.0
  %252 = vmatpush2.msra.mxu0 0.0
  %253 = vmatprep.subr.mxu0 0.0
  %254 = vmatpush2.msra.mxu0 0.0
  %255 = vmatprep.subr.mxu0 0.0
  %256 = vmatpush2.msra.mxu0 0.0
  %257 = vmatprep.subr.mxu0 0.0
  %258 = vmatpush2.msra.mxu0 0.0
  %259 = vmatprep.subr.mxu0 0.0
  %260 = vmatpush2.msra.mxu0 0.0
  %261 = vmatprep.subr.mxu0 0.0
  %262 = vmatpush2.msra.mxu0 0.0
  %263 = vmatprep.subr.mxu0 0.0
  %264 = vmatpush2.msra.mxu0 0.0
  %265 = vmatprep.subr.mxu0 0.0
  %266 = vmatpush2.msra.mxu0 0.0
  %267 = vmatprep.subr.mxu0 0.0
  %268 = vmatpush2.msra.mxu0 0.0
  %269 = vmatprep.subr.mxu0 0.0
  %270 = vmatpush2.msra.mxu0 0.0
  %271 = vmatprep.subr.mxu0 0.0
  %272 = vmatpush2.msra.mxu0 0.0
  %273 = vmatprep.subr.mxu0 0.0
  %274 = vmatpush2.msra.mxu0 0.0
  %275 = vmatprep.subr.mxu0 0.0
  %276 = vmatpush2.msra.mxu0 0.0
  %277 = vmatprep.subr.mxu0 0.0
  %278 = vmatpush2.msra.mxu0 0.0
  %279 = vmatprep.subr.mxu0 0.0
  %280 = vmatpush2.msra.mxu0 0.0
  %281 = vmatprep.subr.mxu0 0.0
  %282 = vmatpush2.msra.mxu0 0.0
  %283 = vmatprep.mubr.f32.mxu0 0.0
  %284 = vmatmul.mubr.f32.gmra.mxu0 %v214
  %v285 = vpop.f32.mrf.mxu0
  %v286 = vadd.f32 %v206, %v285
  %v287 = vpop.f32.mrf.mxu0
  %v288 = vadd.f32 %v206, %v287
  %289 = vmatprep.mubr.f32.mxu0 0.0
  %290 = vmatmul.mubr.f32.gmra.mxu0 %v217
  %v291 = vpop.f32.mrf.mxu0
  %v292 = vadd.f32 %v210, %v291
  %v293 = vpop.f32.mrf.mxu0
  %v294 = vadd.f32 %v210, %v293
  %295 = vdwg.mxu0
  %v296 = vadd.f32 %v286, %v292
  %v297 = vrot.slane %v296, 4
  %v298 = vadd.f32 %v296, %v297
  %v299 = vrot.slane %v298, 2
  %v300 = vadd.f32 %v298, %v299
  %v301 = vrot.slane %v300, 1
  %v302 = vadd.f32 %v300, %v301
  %v303 = vadd.f32 %v288, %v294
  %v304 = vrot.slane %v303, 4
  %v305 = vadd.f32 %v303, %v304
  %v306 = vrot.slane %v305, 2
  %v307 = vadd.f32 %v305, %v306
  %v308 = vrot.slane %v307, 1
  %v309 = vadd.f32 %v307, %v308
  %v310 = vmul.f32 %v302, %v137
  %v311 = vmul.f32 %v309, %v137
  %v312 = vsub.f32 %v286, %v310
  %v313 = vsub.f32 %v288, %v311
  %v314 = vsub.f32 %v292, %v310
  %v315 = vsub.f32 %v294, %v311
  %v316 = vmul.f32 %v312, %v312
  %v317 = vmul.f32 %v313, %v313
  %v318 = vmul.f32 %v314, %v314
  %v319 = vmul.f32 %v315, %v315
  %v320 = vadd.f32 %v316, %v318
  %v321 = vrot.slane %v320, 4
  %v322 = vadd.f32 %v320, %v321
  %v323 = vrot.slane %v322, 2
  %v324 = vadd.f32 %v322, %v323
  %v325 = vrot.slane %v324, 1
  %v326 = vadd.f32 %v324, %v325
  %v327 = vadd.f32 %v317, %v319
  %v328 = vrot.slane %v327, 4
  %v329 = vadd.f32 %v327, %v328
  %v330 = vrot.slane %v329, 2
  %v331 = vadd.f32 %v329, %v330
  %v332 = vrot.slane %v331, 1
  %v333 = vadd.f32 %v331, %v332
  %v334 = vmul.f32 %v326, %v137
  %v335 = vmul.f32 %v333, %v137
  %v336 = vadd.f32 %v334, 1e-05
  %v337 = vadd.f32 %v335, 1e-05
  %v338 = vrsqrt.pop %v336
  %v339 = vrsqrt.pop %v337
  %v340 = vmul.f32 %v312, %v338
  %v341 = vmul.f32 %v313, %v339
  %v342 = vmul.f32 %v314, %v338
  %v343 = vmul.f32 %v315, %v339
  %344 = vset.pattern.permute.xlu0 4
  %345 = vperm.xlu0 %344, %v25
  %v346 = vpop.permute.xlu0 %345
  %348 = vset.pattern.permute.xlu0 4
  %349 = vperm.xlu0 %348, %v26
  %v350 = vpop.permute.xlu0 %349
  %v352 = vmul.f32 %v340, %v346
  %v353 = vmul.f32 %v341, %v346
  %v354 = vmul.f32 %v342, %v350
  %v355 = vmul.f32 %v343, %v350
  %356 = vset.pattern.permute.xlu0 5
  %357 = vperm.xlu0 %356, %v25
  %v358 = vpop.permute.xlu0 %357
  %360 = vset.pattern.permute.xlu0 5
  %361 = vperm.xlu0 %360, %v26
  %v362 = vpop.permute.xlu0 %361
  %v364 = vadd.f32 %v352, %v358
  %v365 = vadd.f32 %v353, %v358
  %v366 = vadd.f32 %v354, %v362
  %v367 = vadd.f32 %v355, %v362
  %v368 = vmul.f32 %v364, 0.01
  %v369 = vmul.f32 %v365, 0.01
  %v370 = vmul.f32 %v366, 0.01
  %v371 = vmul.f32 %v367, 0.01
  %v372 = vmax.f32 %v364, %v368
  %v373 = vmax.f32 %v365, %v369
  %v374 = vmax.f32 %v366, %v370
  %v375 = vmax.f32 %v367, %v371
  %376 = vset.pattern.permute.xlu0 6
  %377 = vperm.xlu0 %376, %v25
  %v378 = vpop.permute.xlu0 %377
  %v381 = vsel %vm212, %v24, 0
  %383 = vmatprep.subr.mxu0 0.0
  %384 = vmatpush1.msra.mxu0 0.0
  %385 = vmatprep.subr.mxu0 0.0
  %386 = vmatpush1.msra.mxu0 0.0
  %387 = vmatprep.subr.mxu0 0.0
  %388 = vmatpush1.msra.mxu0 0.0
  %389 = vmatprep.subr.mxu0 0.0
  %390 = vmatpush1.msra.mxu0 0.0
  %391 = vmatprep.subr.mxu0 0.0
  %392 = vmatpush1.msra.mxu0 0.0
  %393 = vmatprep.subr.mxu0 0.0
  %394 = vmatpush1.msra.mxu0 0.0
  %395 = vmatprep.subr.mxu0 0.0
  %396 = vmatpush1.msra.mxu0 0.0
  %397 = vmatprep.subr.mxu0 0.0
  %398 = vmatpush1.msra.mxu0 0.0
  %399 = vmatprep.subr.mxu0 0.0
  %400 = vmatpush1.msra.mxu0 0.0
  %401 = vmatprep.subr.mxu0 0.0
  %402 = vmatpush1.msra.mxu0 0.0
  %403 = vmatprep.subr.mxu0 0.0
  %404 = vmatpush1.msra.mxu0 0.0
  %405 = vmatprep.subr.mxu0 0.0
  %406 = vmatpush1.msra.mxu0 0.0
  %407 = vmatprep.subr.mxu0 0.0
  %408 = vmatpush1.msra.mxu0 0.0
  %409 = vmatprep.subr.mxu0 0.0
  %410 = vmatpush1.msra.mxu0 0.0
  %411 = vmatprep.subr.mxu0 %v375
  %412 = vmatpush1.msra.mxu0 %v374
  %413 = vmatprep.subr.mxu0 %v373
  %414 = vmatpush1.msra.mxu0 %v372
  %415 = vmatprep.subr.mxu0 0.0
  %416 = vmatpush2.msra.mxu0 0.0
  %417 = vmatprep.subr.mxu0 0.0
  %418 = vmatpush2.msra.mxu0 0.0
  %419 = vmatprep.subr.mxu0 0.0
  %420 = vmatpush2.msra.mxu0 0.0
  %421 = vmatprep.subr.mxu0 0.0
  %422 = vmatpush2.msra.mxu0 0.0
  %423 = vmatprep.subr.mxu0 0.0
  %424 = vmatpush2.msra.mxu0 0.0
  %425 = vmatprep.subr.mxu0 0.0
  %426 = vmatpush2.msra.mxu0 0.0
  %427 = vmatprep.subr.mxu0 0.0
  %428 = vmatpush2.msra.mxu0 0.0
  %429 = vmatprep.subr.mxu0 0.0
  %430 = vmatpush2.msra.mxu0 0.0
  %431 = vmatprep.subr.mxu0 0.0
  %432 = vmatpush2.msra.mxu0 0.0
  %433 = vmatprep.subr.mxu0 0.0
  %434 = vmatpush2.msra.mxu0 0.0
  %435 = vmatprep.subr.mxu0 0.0
  %436 = vmatpush2.msra.mxu0 0.0
  %437 = vmatprep.subr.mxu0 0.0
  %438 = vmatpush2.msra.mxu0 0.0
  %439 = vmatprep.subr.mxu0 0.0
  %440 = vmatpush2.msra.mxu0 0.0
  %441 = vmatprep.subr.mxu0 0.0
  %442 = vmatpush2.msra.mxu0 0.0
  %443 = vmatprep.subr.mxu0 0.0
  %444 = vmatpush2.msra.mxu0 0.0
  %445 = vmatprep.subr.mxu0 0.0
  %446 = vmatpush2.msra.mxu0 0.0
  %447 = vmatprep.mubr.f32.mxu0 0.0
  %448 = vmatmul.mubr.f32.gmra.mxu0 %v381
  %v449 = vpop.f32.mrf.mxu0
  %v450 = vadd.f32 %v378, %v449
  %v451 = vpop.f32.mrf.mxu0
  %v452 = vadd.f32 %v378, %v451
  %453 = vdwg.mxu0
  %454 = vst [vmem:[%s5] sm:$0xff] %v450
  %455 = vst [vmem:[%s5 + $0x8] sm:$0xff] %v452
  %s456 = scalar_lea.vmem %s0, 16
  %v457 = vld [vmem:[%s456] sm:$0xff]
  %v458 = vld [vmem:[%s456 + $0x8] sm:$0xff]
  %459 = vmatprep.subr.mxu0 0.0
  %460 = vmatpush1.msra.mxu0 0.0
  %461 = vmatprep.subr.mxu0 0.0
  %462 = vmatpush1.msra.mxu0 0.0
  %463 = vmatprep.subr.mxu0 0.0
  %464 = vmatpush1.msra.mxu0 0.0
  %465 = vmatprep.subr.mxu0 0.0
  %466 = vmatpush1.msra.mxu0 0.0
  %467 = vmatprep.subr.mxu0 0.0
  %468 = vmatpush1.msra.mxu0 0.0
  %469 = vmatprep.subr.mxu0 0.0
  %470 = vmatpush1.msra.mxu0 0.0
  %471 = vmatprep.subr.mxu0 0.0
  %472 = vmatpush1.msra.mxu0 0.0
  %473 = vmatprep.subr.mxu0 0.0
  %474 = vmatpush1.msra.mxu0 0.0
  %475 = vmatprep.subr.mxu0 0.0
  %476 = vmatpush1.msra.mxu0 0.0
  %477 = vmatprep.subr.mxu0 0.0
  %478 = vmatpush1.msra.mxu0 0.0
  %479 = vmatprep.subr.mxu0 0.0
  %480 = vmatpush1.msra.mxu0 0.0
  %481 = vmatprep.subr.mxu0 0.0
  %482 = vmatpush1.msra.mxu0 0.0
  %483 = vmatprep.subr.mxu0 0.0
  %484 = vmatpush1.msra.mxu0 0.0
  %485 = vmatprep.subr.mxu0 0.0
  %486 = vmatpush1.msra.mxu0 0.0
  %487 = vmatprep.subr.mxu0 0.0
  %488 = vmatpush1.msra.mxu0 0.0
  %489 = vmatprep.subr.mxu0 %v458
  %490 = vmatpush1.msra.mxu0 %v457
  %491 = vmatprep.subr.mxu0 0.0
  %492 = vmatpush2.msra.mxu0 0.0
  %493 = vmatprep.subr.mxu0 0.0
  %494 = vmatpush2.msra.mxu0 0.0
  %495 = vmatprep.subr.mxu0 0.0
  %496 = vmatpush2.msra.mxu0 0.0
  %497 = vmatprep.subr.mxu0 0.0
  %498 = vmatpush2.msra.mxu0 0.0
  %499 = vmatprep.subr.mxu0 0.0
  %500 = vmatpush2.msra.mxu0 0.0
  %501 = vmatprep.subr.mxu0 0.0
  %502 = vmatpush2.msra.mxu0 0.0
  %503 = vmatprep.subr.mxu0 0.0
  %504 = vmatpush2.msra.mxu0 0.0
  %505 = vmatprep.subr.mxu0 0.0
  %506 = vmatpush2.msra.mxu0 0.0
  %507 = vmatprep.subr.mxu0 0.0
  %508 = vmatpush2.msra.mxu0 0.0
  %509 = vmatprep.subr.mxu0 0.0
  %510 = vmatpush2.msra.mxu0 0.0
  %511 = vmatprep.subr.mxu0 0.0
  %512 = vmatpush2.msra.mxu0 0.0
  %513 = vmatprep.subr.mxu0 0.0
  %514 = vmatpush2.msra.mxu0 0.0
  %515 = vmatprep.subr.mxu0 0.0
  %516 = vmatpush2.msra.mxu0 0.0
  %517 = vmatprep.subr.mxu0 0.0
  %518 = vmatpush2.msra.mxu0 0.0
  %519 = vmatprep.subr.mxu0 0.0
  %520 = vmatpush2.msra.mxu0 0.0
  %521 = vmatprep.subr.mxu0 0.0
  %522 = vmatpush2.msra.mxu0 0.0
  %523 = vmatprep.mubr.f32.mxu0 0.0
  %524 = vmatmul.mubr.f32.gmra.mxu0 %v41
  %v525 = vpop.f32.mrf.mxu0
  %v526 = vadd.f32 %v32, %v525
  %v527 = vpop.f32.mrf.mxu0
  %v528 = vadd.f32 %v32, %v527
  %529 = vmatprep.mubr.f32.mxu0 0.0
  %530 = vmatmul.mubr.f32.gmra.mxu0 %v44
  %v531 = vpop.f32.mrf.mxu0
  %v532 = vadd.f32 %v37, %v531
  %v533 = vpop.f32.mrf.mxu0
  %v534 = vadd.f32 %v37, %v533
  %535 = vdwg.mxu0
  %v536 = vadd.f32 %v526, %v532
  %v537 = vrot.slane %v536, 4
  %v538 = vadd.f32 %v536, %v537
  %v539 = vrot.slane %v538, 2
  %v540 = vadd.f32 %v538, %v539
  %v541 = vrot.slane %v540, 1
  %v542 = vadd.f32 %v540, %v541
  %v543 = vadd.f32 %v528, %v534
  %v544 = vrot.slane %v543, 4
  %v545 = vadd.f32 %v543, %v544
  %v546 = vrot.slane %v545, 2
  %v547 = vadd.f32 %v545, %v546
  %v548 = vrot.slane %v547, 1
  %v549 = vadd.f32 %v547, %v548
  %v550 = vmul.f32 %v542, %v137
  %v551 = vmul.f32 %v549, %v137
  %v552 = vsub.f32 %v526, %v550
  %v553 = vsub.f32 %v528, %v551
  %v554 = vsub.f32 %v532, %v550
  %v555 = vsub.f32 %v534, %v551
  %v556 = vmul.f32 %v552, %v552
  %v557 = vmul.f32 %v553, %v553
  %v558 = vmul.f32 %v554, %v554
  %v559 = vmul.f32 %v555, %v555
  %v560 = vadd.f32 %v556, %v558
  %v561 = vrot.slane %v560, 4
  %v562 = vadd.f32 %v560, %v561
  %v563 = vrot.slane %v562, 2
  %v564 = vadd.f32 %v562, %v563
  %v565 = vrot.slane %v564, 1
  %v566 = vadd.f32 %v564, %v565
  %v567 = vadd.f32 %v557, %v559
  %v568 = vrot.slane %v567, 4
  %v569 = vadd.f32 %v567, %v568
  %v570 = vrot.slane %v569, 2
  %v571 = vadd.f32 %v569, %v570
  %v572 = vrot.slane %v571, 1
  %v573 = vadd.f32 %v571, %v572
  %v574 = vmul.f32 %v566, %v137
  %v575 = vmul.f32 %v573, %v137
  %v576 = vadd.f32 %v574, 1e-05
  %v577 = vadd.f32 %v575, 1e-05
  %v578 = vrsqrt.pop %v576
  %v579 = vrsqrt.pop %v577
  %v580 = vmul.f32 %v552, %v578
  %v581 = vmul.f32 %v553, %v579
  %v582 = vmul.f32 %v554, %v578
  %v583 = vmul.f32 %v555, %v579
  %v584 = vmul.f32 %v580, %v174
  %v585 = vmul.f32 %v581, %v174
  %v586 = vmul.f32 %v582, %v178
  %v587 = vmul.f32 %v583, %v178
  %v588 = vadd.f32 %v584, %v186
  %v589 = vadd.f32 %v585, %v186
  %v590 = vadd.f32 %v586, %v190
  %v591 = vadd.f32 %v587, %v190
  %v592 = vmul.f32 %v588, 0.01
  %v593 = vmul.f32 %v589, 0.01
  %v594 = vmul.f32 %v590, 0.01
  %v595 = vmul.f32 %v591, 0.01
  %v596 = vmax.f32 %v588, %v592
  %v597 = vmax.f32 %v589, %v593
  %v598 = vmax.f32 %v590, %v594
  %v599 = vmax.f32 %v591, %v595
  %600 = vmatprep.subr.mxu0 0.0
  %601 = vmatpush1.msra.mxu0 0.0
  %602 = vmatprep.subr.mxu0 0.0
  %603 = vmatpush1.msra.mxu0 0.0
  %604 = vmatprep.subr.mxu0 0.0
  %605 = vmatpush1.msra.mxu0 0.0
  %606 = vmatprep.subr.mxu0 0.0
  %607 = vmatpush1.msra.mxu0 0.0
  %608 = vmatprep.subr.mxu0 0.0
  %609 = vmatpush1.msra.mxu0 0.0
  %610 = vmatprep.subr.mxu0 0.0
  %611 = vmatpush1.msra.mxu0 0.0
  %612 = vmatprep.subr.mxu0 0.0
  %613 = vmatpush1.msra.mxu0 0.0
  %614 = vmatprep.subr.mxu0 0.0
  %615 = vmatpush1.msra.mxu0 0.0
  %616 = vmatprep.subr.mxu0 0.0
  %617 = vmatpush1.msra.mxu0 0.0
  %618 = vmatprep.subr.mxu0 0.0
  %619 = vmatpush1.msra.mxu0 0.0
  %620 = vmatprep.subr.mxu0 0.0
  %621 = vmatpush1.msra.mxu0 0.0
  %622 = vmatprep.subr.mxu0 0.0
  %623 = vmatpush1.msra.mxu0 0.0
  %624 = vmatprep.subr.mxu0 0.0
  %625 = vmatpush1.msra.mxu0 0.0
  %626 = vmatprep.subr.mxu0 0.0
  %627 = vmatpush1.msra.mxu0 0.0
  %628 = vmatprep.subr.mxu0 %v599
  %629 = vmatpush1.msra.mxu0 %v598
  %630 = vmatprep.subr.mxu0 %v597
  %631 = vmatpush1.msra.mxu0 %v596
  %632 = vmatprep.subr.mxu0 0.0
  %633 = vmatpush2.msra.mxu0 0.0
  %634 = vmatprep.subr.mxu0 0.0
  %635 = vmatpush2.msra.mxu0 0.0
  %636 = vmatprep.subr.mxu0 0.0
  %637 = vmatpush2.msra.mxu0 0.0
  %638 = vmatprep.subr.mxu0 0.0
  %639 = vmatpush2.msra.mxu0 0.0
  %640 = vmatprep.subr.mxu0 0.0
  %641 = vmatpush2.msra.mxu0 0.0
  %642 = vmatprep.subr.mxu0 0.0
  %643 = vmatpush2.msra.mxu0 0.0
  %644 = vmatprep.subr.mxu0 0.0
  %645 = vmatpush2.msra.mxu0 0.0
  %646 = vmatprep.subr.mxu0 0.0
  %647 = vmatpush2.msra.mxu0 0.0
  %648 = vmatprep.subr.mxu0 0.0
  %649 = vmatpush2.msra.mxu0 0.0
  %650 = vmatprep.subr.mxu0 0.0
  %651 = vmatpush2.msra.mxu0 0.0
  %652 = vmatprep.subr.mxu0 0.0
  %653 = vmatpush2.msra.mxu0 0.0
  %654 = vmatprep.subr.mxu0 0.0
  %655 = vmatpush2.msra.mxu0 0.0
  %656 = vmatprep.subr.mxu0 0.0
  %657 = vmatpush2.msra.mxu0 0.0
  %658 = vmatprep.subr.mxu0 0.0
  %659 = vmatpush2.msra.mxu0 0.0
  %660 = vmatprep.subr.mxu0 0.0
  %661 = vmatpush2.msra.mxu0 0.0
  %662 = vmatprep.subr.mxu0 0.0
  %663 = vmatpush2.msra.mxu0 0.0
  %664 = vmatprep.mubr.f32.mxu0 0.0
  %665 = vmatmul.mubr.f32.gmra.mxu0 %v214
  %v666 = vpop.f32.mrf.mxu0
  %v667 = vadd.f32 %v206, %v666
  %v668 = vpop.f32.mrf.mxu0
  %v669 = vadd.f32 %v206, %v668
  %670 = vmatprep.mubr.f32.mxu0 0.0
  %671 = vmatmul.mubr.f32.gmra.mxu0 %v217
  %v672 = vpop.f32.mrf.mxu0
  %v673 = vadd.f32 %v210, %v672
  %v674 = vpop.f32.mrf.mxu0
  %v675 = vadd.f32 %v210, %v674
  %676 = vdwg.mxu0
  %v677 = vadd.f32 %v667, %v673
  %v678 = vrot.slane %v677, 4
  %v679 = vadd.f32 %v677, %v678
  %v680 = vrot.slane %v679, 2
  %v681 = vadd.f32 %v679, %v680
  %v682 = vrot.slane %v681, 1
  %v683 = vadd.f32 %v681, %v682
  %v684 = vadd.f32 %v669, %v675
  %v685 = vrot.slane %v684, 4
  %v686 = vadd.f32 %v684, %v685
  %v687 = vrot.slane %v686, 2
  %v688 = vadd.f32 %v686, %v687
  %v689 = vrot.slane %v688, 1
  %v690 = vadd.f32 %v688, %v689
  %v691 = vmul.f32 %v683, %v137
  %v692 = vmul.f32 %v690, %v137
  %v693 = vsub.f32 %v667, %v691
  %v694 = vsub.f32 %v669, %v692
  %v695 = vsub.f32 %v673, %v691
  %v696 = vsub.f32 %v675, %v692
  %v697 = vmul.f32 %v693, %v693
  %v698 = vmul.f32 %v694, %v694
  %v699 = vmul.f32 %v695, %v695
  %v700 = vmul.f32 %v696, %v696
  %v701 = vadd.f32 %v697, %v699
  %v702 = vrot.slane %v701, 4
  %v703 = vadd.f32 %v701, %v702
  %v704 = vrot.slane %v703, 2
  %v705 = vadd.f32 %v703, %v704
  %v706 = vrot.slane %v705, 1
  %v707 = vadd.f32 %v705, %v706
  %v708 = vadd.f32 %v698, %v700
  %v709 = vrot.slane %v708, 4
  %v710 = vadd.f32 %v708, %v709
  %v711 = vrot.slane %v710, 2
  %v712 = vadd.f32 %v710, %v711
  %v713 = vrot.slane %v712, 1
  %v714 = vadd.f32 %v712, %v713
  %v715 = vmul.f32 %v707, %v137
  %v716 = vmul.f32 %v714, %v137
  %v717 = vadd.f32 %v715, 1e-05
  %v718 = vadd.f32 %v716, 1e-05
  %v719 = vrsqrt.pop %v717
  %v720 = vrsqrt.pop %v718
  %v721 = vmul.f32 %v693, %v719
  %v722 = vmul.f32 %v694, %v720
  %v723 = vmul.f32 %v695, %v719
  %v724 = vmul.f32 %v696, %v720
  %v725 = vmul.f32 %v721, %v346
  %v726 = vmul.f32 %v722, %v346
  %v727 = vmul.f32 %v723, %v350
  %v728 = vmul.f32 %v724, %v350
  %v729 = vadd.f32 %v725, %v358
  %v730 = vadd.f32 %v726, %v358
  %v731 = vadd.f32 %v727, %v362
  %v732 = vadd.f32 %v728, %v362
  %v733 = vmul.f32 %v729, 0.01
  %v734 = vmul.f32 %v730, 0.01
  %v735 = vmul.f32 %v731, 0.01
  %v736 = vmul.f32 %v732, 0.01
  %v737 = vmax.f32 %v729, %v733
  %v738 = vmax.f32 %v730, %v734
  %v739 = vmax.f32 %v731, %v735
  %v740 = vmax.f32 %v732, %v736
  %741 = vmatprep.subr.mxu0 0.0
  %742 = vmatpush1.msra.mxu0 0.0
  %743 = vmatprep.subr.mxu0 0.0
  %744 = vmatpush1.msra.mxu0 0.0
  %745 = vmatprep.subr.mxu0 0.0
  %746 = vmatpush1.msra.mxu0 0.0
  %747 = vmatprep.subr.mxu0 0.0
  %748 = vmatpush1.msra.mxu0 0.0
  %749 = vmatprep.subr.mxu0 0.0
  %750 = vmatpush1.msra.mxu0 0.0
  %751 = vmatprep.subr.mxu0 0.0
  %752 = vmatpush1.msra.mxu0 0.0
  %753 = vmatprep.subr.mxu0 0.0
  %754 = vmatpush1.msra.mxu0 0.0
  %755 = vmatprep.subr.mxu0 0.0
  %756 = vmatpush1.msra.mxu0 0.0
  %757 = vmatprep.subr.mxu0 0.0
  %758 = vmatpush1.msra.mxu0 0.0
  %759 = vmatprep.subr.mxu0 0.0
  %760 = vmatpush1.msra.mxu0 0.0
  %761 = vmatprep.subr.mxu0 0.0
  %762 = vmatpush1.msra.mxu0 0.0
  %763 = vmatprep.subr.mxu0 0.0
  %764 = vmatpush1.msra.mxu0 0.0
  %765 = vmatprep.subr.mxu0 0.0
  %766 = vmatpush1.msra.mxu0 0.0
  %767 = vmatprep.subr.mxu0 0.0
  %768 = vmatpush1.msra.mxu0 0.0
  %769 = vmatprep.subr.mxu0 %v740
  %770 = vmatpush1.msra.mxu0 %v739
  %771 = vmatprep.subr.mxu0 %v738
  %772 = vmatpush1.msra.mxu0 %v737
  %773 = vmatprep.subr.mxu0 0.0
  %774 = vmatpush2.msra.mxu0 0.0
  %775 = vmatprep.subr.mxu0 0.0
  %776 = vmatpush2.msra.mxu0 0.0
  %777 = vmatprep.subr.mxu0 0.0
  %778 = vmatpush2.msra.mxu0 0.0
  %779 = vmatprep.subr.mxu0 0.0
  %780 = vmatpush2.msra.mxu0 0.0
  %781 = vmatprep.subr.mxu0 0.0
  %782 = vmatpush2.msra.mxu0 0.0
  %783 = vmatprep.subr.mxu0 0.0
  %784 = vmatpush2.msra.mxu0 0.0
  %785 = vmatprep.subr.mxu0 0.0
  %786 = vmatpush2.msra.mxu0 0.0
  %787 = vmatprep.subr.mxu0 0.0
  %788 = vmatpush2.msra.mxu0 0.0
  %789 = vmatprep.subr.mxu0 0.0
  %790 = vmatpush2.msra.mxu0 0.0
  %791 = vmatprep.subr.mxu0 0.0
  %792 = vmatpush2.msra.mxu0 0.0
  %793 = vmatprep.subr.mxu0 0.0
  %794 = vmatpush2.msra.mxu0 0.0
  %795 = vmatprep.subr.mxu0 0.0
  %796 = vmatpush2.msra.mxu0 0.0
  %797 = vmatprep.subr.mxu0 0.0
  %798 = vmatpush2.msra.mxu0 0.0
  %799 = vmatprep.subr.mxu0 0.0
  %800 = vmatpush2.msra.mxu0 0.0
  %801 = vmatprep.subr.mxu0 0.0
  %802 = vmatpush2.msra.mxu0 0.0
  %803 = vmatprep.subr.mxu0 0.0
  %804 = vmatpush2.msra.mxu0 0.0
  %805 = vmatprep.mubr.f32.mxu0 0.0
  %806 = vmatmul.mubr.f32.gmra.mxu0 %v381
  %v807 = vpop.f32.mrf.mxu0
  %v808 = vadd.f32 %v378, %v807
  %v809 = vpop.f32.mrf.mxu0
  %v810 = vadd.f32 %v378, %v809
  %811 = vdwg.mxu0
  %s812 = scalar_lea.vmem %s5, 16
  %813 = vst [vmem:[%s812] sm:$0xff] %v808
  %814 = vst [vmem:[%s812 + $0x8] sm:$0xff] %v810
  // Predicated region
  $region22: #{basic_mca_block_forward.1} parent=0 // pred_check
    _
  $region23: #{basic_mca_block_forward.1} parent=0 // pred_check_branch
    %816 = sbr.rel (0) target = $region25
  $region24: #{basic_mca_block_forward.1} parent=0 // pred_region
    _
  $region25: #{basic_mca_block_forward.1} parent=0 // pred_fallthru
    _
  // Predicated region
  $region26: #{basic_mca_block_forward.1} parent=0 // pred_check
    _
  $region27: #{basic_mca_block_forward.1} parent=0 // pred_check_branch
    %818 = sbr.rel (0) target = $region29
  $region28: #{basic_mca_block_forward.1} parent=0 // pred_region
    _
  $region29: #{basic_mca_block_forward.1} parent=0 // pred_fallthru
    _

</llo_original>
